<compile_context>
chip_gen: v6e
topology: v6e:2x2x1
jax: 0.10.0
libtpu: 0.0.40
codegen_flags: <defaults>
</compile_context>

<pallas_src>
import functools

import jax
import jax.numpy as jnp
from jax.experimental import pallas as pl
from jax.experimental.pallas import tpu as pltpu


def _round_up(x, m):
    return ((x + m - 1) // m) * m


def _kl_axis_kernel(pred_ref, tgt_ref, w_ref, out_ref, *, beta, label_softmax,
                    num_rows, skip_label_entropy):
    """One row-tile: weighted KL partial sum, written as a lane-dense block."""
    tile_r = pred_ref.shape[0]
    row0 = pl.program_id(0) * tile_r
    rows = row0 + jax.lax.broadcasted_iota(jnp.int32, (tile_r, 1), 0)
    valid = rows < num_rows                                   # tail-row mask

    # log_softmax(pred * beta) along the simcc-bin (lane) axis; log_pt itself
    # is never materialized -- it is folded into per-row sums below.
    p = pred_ref[...].astype(jnp.float32) * beta
    p_max = jnp.max(p, axis=-1, keepdims=True)
    lse = p_max + jnp.log(jnp.sum(jnp.exp(p - p_max), axis=-1, keepdims=True))

    t_in = tgt_ref[...].astype(jnp.float32)
    if label_softmax:
        tl = t_in * beta
        t_max = jnp.max(tl, axis=-1, keepdims=True)
        t_shift = tl - t_max
        t_exp = jnp.exp(t_shift)
        t_sum = jnp.sum(t_exp, axis=-1, keepdims=True)
        inv_t_sum = pl.reciprocal(t_sum, approx=False)        # per-row only
        # sum_j t*p with t = t_exp / t_sum, never materializing the divide.
        t_p_sum = jnp.sum(t_exp * p, axis=-1, keepdims=True) * inv_t_sum
        if skip_label_entropy:
            t_log_t_sum = jnp.zeros_like(t_sum)
        else:
            # sum_j t*log(t) = sum_j(t_exp*t_shift)/t_sum - log(t_sum):
            # one log per row instead of one per element.
            t_log_t_sum = (jnp.sum(t_exp * t_shift, axis=-1, keepdims=True)
                           * inv_t_sum - jnp.log(t_sum))
        t_sum_row = jnp.ones_like(t_sum)                      # sum(t) == 1
    else:
        t = t_in
        t_p_sum = jnp.sum(t * p, axis=-1, keepdims=True)
        if skip_label_entropy:
            t_log_t_sum = jnp.zeros_like(t_p_sum)
        else:
            safe_log_t = jnp.log(jnp.where(t > 0, t, 1.0))
            t_log_t_sum = jnp.sum(jnp.where(t > 0, t * safe_log_t, 0.0),
                                  axis=-1, keepdims=True)
        t_sum_row = jnp.sum(t, axis=-1, keepdims=True)

    # Per-row KL row-sum: sum_j t*log_pt = sum_j t*p - lse * sum_j t.
    row_kl = t_log_t_sum - (t_p_sum - lse * t_sum_row)        # (tile_r, 1)
    row_kl = jnp.where(valid, row_kl, 0.0)                    # kill OOB garbage

    # Weight is lane-dense (1, tile_r), already folded with 1/(W*num_joints)
    # and zero-padded past num_rows; weighted row-sum as a tiny contraction.
    w_row = w_ref[0]                                          # (1, tile_r)
    partial = jnp.dot(w_row, row_kl,
                      preferred_element_type=jnp.float32)     # (1, 1)
    out_ref[...] = jnp.broadcast_to(partial, out_ref.shape)   # lane-dense store


def _axis_loss(pred, target, weight, *, beta, label_softmax,
               skip_label_entropy=False, max_rows_per_block=None):
    """Weighted KL contribution summed over all rows for one simcc axis."""
    R, W = pred.shape
    itemsize = jnp.dtype(pred.dtype).itemsize
    sub = 16 if itemsize <= 2 else 8          # bf16 sublane packing

    # Per-grid-step pred+target byte budget.  Pallas double-buffers each input
    # and the kernel keeps a few (tile_r, W) f32 temporaries live, so ~6 MiB of
    # inputs per step keeps the total comfortably under the 32 MiB scoped-VMEM
    # limit requested below on every generation (v7x physical VMEM is 64 MiB).
    budget = 6 * 1024 * 1024
    cap = (budget // (2 * W * itemsize)) // sub * sub
    cap = max(sub, min(cap, 2048))
    if max_rows_per_block is not None:
        cap = max(sub, min(cap, (max_rows_per_block // sub) * sub))

    # Prefer >= 2 blocks whenever possible so the "parallel" grid axis can be
    # sharded across both v7x TensorCores.
    nblk_target = max(2, pl.cdiv(R, cap)) if R > sub else 1
    tile_r = _round_up(pl.cdiv(R, nblk_target), sub)
    tile_r = min(tile_r, cap)
    if tile_r >= R:
        tile_r = R                             # full extent is always legal
    num_blocks = pl.cdiv(R, tile_r)

    # Lane-dense, zero-padded weight: one contiguous (1, tile_r) row per block
    # instead of a lane-sparse (tile_r, 1) column DMA.
    w_flat = jnp.zeros((num_blocks * tile_r,), jnp.float32)
    w_flat = w_flat.at[:R].set(weight.astype(jnp.float32))
    w3 = w_flat.reshape(num_blocks, 1, tile_r)

    kernel = functools.partial(
        _kl_axis_kernel, beta=float(beta), label_softmax=bool(label_softmax),
        num_rows=R, skip_label_entropy=bool(skip_label_entropy))

    cost = pl.CostEstimate(
        flops=10 * R * W + 2 * num_blocks * tile_r,
        transcendentals=2 * R * W,
        bytes_accessed=(2 * R * W * itemsize + num_blocks * tile_r * 4
                        + num_blocks * 8 * 128 * 4),
    )

    out = pl.pallas_call(
        kernel,
        out_shape=jax.ShapeDtypeStruct((num_blocks, 8, 128), jnp.float32),
        grid_spec=pltpu.PrefetchScalarGridSpec(
            num_scalar_prefetch=0,
            grid=(num_blocks,),
            in_specs=[
                pl.BlockSpec((tile_r, W), lambda i: (i, 0)),
                pl.BlockSpec((tile_r, W), lambda i: (i, 0)),
                pl.BlockSpec((1, 1, tile_r), lambda i: (i, 0, 0)),
            ],
            out_specs=pl.BlockSpec((1, 8, 128), lambda i: (i, 0, 0)),
        ),
        compiler_params=pltpu.CompilerParams(
            dimension_semantics=("parallel",),
            vmem_limit_bytes=32 * 1024 * 1024,
        ),
        cost_estimate=cost,
    )(pred, target, w3)

    # Tiny cross-block reduction of the per-block partial sums.
    return jnp.sum(out[:, 0, 0])


def kl_discret_loss(pred_simcc, gt_simcc, target_weight,
                    beta=1.0, label_softmax=False, use_target_weight=True,
                    skip_label_entropy=False, max_rows_per_block=None):
    """Forward pass equivalent of mmpose KLDiscretLoss.

    Inputs may be float32 or bfloat16 (bf16 halves HBM traffic; the kernel
    upcasts to float32 internally).  skip_label_entropy drops the constant
    xlogy(labels, labels) term (gradient-only use); default False.
    """
    num_joints = pred_simcc[0].shape[1]

    loss = jnp.float32(0.0)
    for pred, target in zip(pred_simcc, gt_simcc):
        p = pred.reshape(-1, pred.shape[-1])
        t = target.reshape(-1, target.shape[-1])
        R, W = p.shape
        if use_target_weight:
            w = target_weight.reshape(-1).astype(jnp.float32)
        else:
            w = jnp.ones((R,), jnp.float32)
        # Fold the KL mean (1/W) and the final 1/num_joints into the weight.
        w = w * jnp.float32(1.0 / (W * num_joints))
        loss = loss + _axis_loss(p, t, w, beta=beta,
                                 label_softmax=label_softmax,
                                 skip_label_entropy=skip_label_entropy,
                                 max_rows_per_block=max_rows_per_block)
    return loss


def _reference_loss(pred_simcc, gt_simcc, target_weight,
                    beta=1.0, label_softmax=False, use_target_weight=True):
    """Pure-JAX reference mirroring the PyTorch code (for correctness check)."""
    num_joints = pred_simcc[0].shape[1]
    weight = (target_weight.reshape(-1).astype(jnp.float32)
              if use_target_weight else 1.0)
    loss = jnp.float32(0.0)
    for pred, target in zip(pred_simcc, gt_simcc):
        p = pred.reshape(-1, pred.shape[-1]).astype(jnp.float32)
        t = target.reshape(-1, target.shape[-1]).astype(jnp.float32)
        log_pt = jax.nn.log_softmax(p * beta, axis=1)
        if label_softmax:
            t = jax.nn.softmax(t * beta, axis=1)
        xlogy = jnp.where(t > 0, t * jnp.log(jnp.where(t > 0, t, 1.0)), 0.0)
        kl = xlogy - t * log_pt
        row = jnp.mean(kl, axis=1)
        loss = loss + jnp.sum(row * weight)
    return loss / num_joints


if __name__ == "__main__":
    key = jax.random.PRNGKey(0)
    k1, k2, k3, k4, k5 = jax.random.split(key, 5)

    # Small SimCC-like shapes: N=2 samples, K=4 keypoints, Wx=192 / Wy=256 bins.
    N, K, Wx, Wy = 2, 4, 192, 256
    pred_x = jax.random.normal(k1, (N, K, Wx), dtype=jnp.float32)
    pred_y = jax.random.normal(k2, (N, K, Wy), dtype=jnp.float32)
    # Targets built as proper distributions (used for label_softmax=False path).
    gt_x = jax.nn.softmax(2.0 * jax.random.normal(k3, (N, K, Wx)), axis=-1)
    gt_y = jax.nn.softmax(2.0 * jax.random.normal(k4, (N, K, Wy)), axis=-1)
    target_weight = jax.random.uniform(k5, (N, K), dtype=jnp.float32)

    configs = [
        dict(beta=1.0, label_softmax=False, use_target_weight=True),
        dict(beta=10.0, label_softmax=True, use_target_weight=True),
    ]

    # float32 inputs, strict tolerance vs the f32 reference.
    for cfg in configs:
        loss = jax.block_until_ready(
            kl_discret_loss((pred_x, pred_y), (gt_x, gt_y), target_weight,
                            **cfg))
        ref = _reference_loss((pred_x, pred_y), (gt_x, gt_y), target_weight,
                              **cfg)
        assert jnp.allclose(loss, ref, rtol=1e-4, atol=1e-5), (cfg, loss, ref)

    # bfloat16 inputs (half the HBM stream); reference uses the same bf16
    # values upcast to f32, so only reduction-order noise remains.
    pxb, pyb = pred_x.astype(jnp.bfloat16), pred_y.astype(jnp.bfloat16)
    gxb, gyb = gt_x.astype(jnp.bfloat16), gt_y.astype(jnp.bfloat16)
    for cfg in configs:
        loss = jax.block_until_ready(
            kl_discret_loss((pxb, pyb), (gxb, gyb), target_weight, **cfg))
        ref = _reference_loss((pxb, pyb), (gxb, gyb), target_weight, **cfg)
        assert jnp.allclose(loss, ref, rtol=1e-3, atol=1e-4), (cfg, loss, ref)

    # Partial trailing row-block: R=15 with forced 8-row tiles -> 2 grid blocks,
    # masked tail row + zero-padded weight tail (validates no double counting).
    k6, k7, k8, k9, k10 = jax.random.split(jax.random.PRNGKey(1), 5)
    N2, K2, Wx2, Wy2 = 3, 5, 160, 192
    px2 = jax.random.normal(k6, (N2, K2, Wx2), dtype=jnp.float32)
    py2 = jax.random.normal(k7, (N2, K2, Wy2), dtype=jnp.float32)
    gx2 = jax.nn.softmax(2.0 * jax.random.normal(k8, (N2, K2, Wx2)), axis=-1)
    gy2 = jax.nn.softmax(2.0 * jax.random.normal(k9, (N2, K2, Wy2)), axis=-1)
    tw2 = jax.random.uniform(k10, (N2, K2), dtype=jnp.float32)
    for cfg in configs:
        loss = jax.block_until_ready(
            kl_discret_loss((px2, py2), (gx2, gy2), tw2,
                            max_rows_per_block=8, **cfg))
        ref = _reference_loss((px2, py2), (gx2, gy2), tw2, **cfg)
        assert jnp.allclose(loss, ref, rtol=1e-4, atol=1e-5), (cfg, loss, ref)

    print("KERNEL_OK")
</pallas_src>

<mosaic_0001>
module attributes {stable_mosaic.version = 11 : i64} {
  func.func @_kl_axis_kernel(%arg0: i32, %arg1: memref<8x192xf32, #tpu.memory_space<vmem>>, %arg2: memref<8x192xf32, #tpu.memory_space<vmem>>, %arg3: memref<1x1x8xf32, #tpu.memory_space<vmem>>, %arg4: memref<1x8x128xf32, #tpu.memory_space<vmem>>) attributes {dimension_semantics = [#tpu.dimension_semantics<parallel>], iteration_bounds = array<i64: 1>, scalar_prefetch = 0 : i64, scratch_operands = 0 : i64, tpu.core_type = #tpu.core_type<tc>, window_params = [{transform_indices = @transform_0, window_bounds = array<i64: 8, 192>}, {transform_indices = @transform_1, window_bounds = array<i64: 8, 192>}, {transform_indices = @transform_2, window_bounds = array<i64: 1, 1, 8>}, {transform_indices = @transform_3, window_bounds = array<i64: 1, 8, 128>}]} {
    %c8_i32 = arith.constant 8 : i32
    %0 = arith.muli %arg0, %c8_i32 : i32
    %1 = tpu.iota {dimensions = array<i32: 0>} : vector<8x1xi32>
    %2 = vector.broadcast %0 : i32 to vector<8x1xi32>
    %3 = arith.addi %2, %1 : vector<8x1xi32>
    %c8_i32_0 = arith.constant 8 : i32
    %4 = vector.broadcast %c8_i32_0 : i32 to vector<8x1xi32>
    %5 = arith.cmpi slt, %3, %4 : vector<8x1xi32>
    %c0 = arith.constant 0 : index
    %c0_1 = arith.constant 0 : index
    %6 = vector.load %arg1[%c0, %c0_1] : memref<8x192xf32, #tpu.memory_space<vmem>>, vector<8x192xf32>
    %cst = arith.constant 1.000000e+00 : f32
    %7 = vector.broadcast %cst : f32 to vector<8x192xf32>
    %8 = arith.mulf %6, %7 : vector<8x192xf32>
    %cst_2 = arith.constant dense<0xFF800000> : vector<8xf32>
    %9 = vector.multi_reduction <maximumf>, %8, %cst_2 [1] : vector<8x192xf32> to vector<8xf32>
    %10 = vector.shape_cast %9 : vector<8xf32> to vector<8x1xf32>
    %11 = vector.broadcast %10 : vector<8x1xf32> to vector<8x192xf32>
    %12 = arith.subf %8, %11 : vector<8x192xf32>
    %13 = math.exp %12 : vector<8x192xf32>
    %cst_3 = arith.constant dense<0.000000e+00> : vector<8xf32>
    %14 = vector.multi_reduction <add>, %13, %cst_3 [1] : vector<8x192xf32> to vector<8xf32>
    %15 = vector.shape_cast %14 : vector<8xf32> to vector<8x1xf32>
    %16 = math.log %15 : vector<8x1xf32>
    %17 = arith.addf %10, %16 : vector<8x1xf32>
    %c0_4 = arith.constant 0 : index
    %c0_5 = arith.constant 0 : index
    %18 = vector.load %arg2[%c0_4, %c0_5] : memref<8x192xf32, #tpu.memory_space<vmem>>, vector<8x192xf32>
    %19 = arith.mulf %18, %8 : vector<8x192xf32>
    %cst_6 = arith.constant dense<0.000000e+00> : vector<8xf32>
    %20 = vector.multi_reduction <add>, %19, %cst_6 [1] : vector<8x192xf32> to vector<8xf32>
    %21 = vector.shape_cast %20 : vector<8xf32> to vector<8x1xf32>
    %cst_7 = arith.constant 0.000000e+00 : f32
    %22 = vector.broadcast %cst_7 : f32 to vector<8x192xf32>
    %23 = arith.cmpf ogt, %18, %22 : vector<8x192xf32>
    %cst_8 = arith.constant 1.000000e+00 : f32
    %24 = vector.broadcast %cst_8 : f32 to vector<8x192xf32>
    %25 = arith.select %23, %18, %24 : vector<8x192xi1>, vector<8x192xf32>
    %26 = math.log %25 : vector<8x192xf32>
    %cst_9 = arith.constant 0.000000e+00 : f32
    %27 = vector.broadcast %cst_9 : f32 to vector<8x192xf32>
    %28 = arith.cmpf ogt, %18, %27 : vector<8x192xf32>
    %29 = arith.mulf %18, %26 : vector<8x192xf32>
    %cst_10 = arith.constant 0.000000e+00 : f32
    %30 = vector.broadcast %cst_10 : f32 to vector<8x192xf32>
    %31 = arith.select %28, %29, %30 : vector<8x192xi1>, vector<8x192xf32>
    %cst_11 = arith.constant dense<0.000000e+00> : vector<8xf32>
    %32 = vector.multi_reduction <add>, %31, %cst_11 [1] : vector<8x192xf32> to vector<8xf32>
    %33 = vector.shape_cast %32 : vector<8xf32> to vector<8x1xf32>
    %cst_12 = arith.constant dense<0.000000e+00> : vector<8xf32>
    %34 = vector.multi_reduction <add>, %18, %cst_12 [1] : vector<8x192xf32> to vector<8xf32>
    %35 = vector.shape_cast %34 : vector<8xf32> to vector<8x1xf32>
    %36 = arith.mulf %17, %35 : vector<8x1xf32>
    %37 = arith.subf %21, %36 : vector<8x1xf32>
    %38 = arith.subf %33, %37 : vector<8x1xf32>
    %cst_13 = arith.constant 0.000000e+00 : f32
    %39 = vector.broadcast %cst_13 : f32 to vector<8x1xf32>
    %40 = arith.select %5, %38, %39 : vector<8x1xi1>, vector<8x1xf32>
    %c0_14 = arith.constant 0 : index
    %c0_15 = arith.constant 0 : index
    %c0_16 = arith.constant 0 : index
    %41 = vector.load %arg3[%c0_14, %c0_15, %c0_16] : memref<1x1x8xf32, #tpu.memory_space<vmem>>, vector<1x1x8xf32>
    %42 = vector.shape_cast %41 : vector<1x1x8xf32> to vector<1x8xf32>
    %cst_17 = arith.constant dense<0.000000e+00> : vector<1x1xf32>
    %43 = tpu.matmul %42, %40, %cst_17 {dimension_numbers = #tpu.dot_dimension_numbers<[1], [0], [0], [1], [0, 0, 1, 1], [], []>} : vector<1x8xf32>, vector<8x1xf32>, vector<1x1xf32> -> vector<1x1xf32>
    %44 = vector.shape_cast %43 : vector<1x1xf32> to vector<1x1x1xf32>
    %45 = vector.broadcast %44 : vector<1x1x1xf32> to vector<1x8x128xf32>
    %c0_18 = arith.constant 0 : index
    %c0_19 = arith.constant 0 : index
    %c0_20 = arith.constant 0 : index
    %46 = vector.load %arg4[%c0_18, %c0_19, %c0_20] : memref<1x8x128xf32, #tpu.memory_space<vmem>>, vector<1x8x128xf32>
    tpu.vector_store %arg4[%c0_18, %c0_19, %c0_20], %45 {strides = array<i32>} : memref<1x8x128xf32, #tpu.memory_space<vmem>>, vector<1x8x128xf32>,
    return
  }
  func.func @transform_0(%arg0: i32) -> (i32, i32) {
    %c0_i32 = arith.constant 0 : i32
    %c0_i32_0 = arith.constant 0 : i32
    return %arg0, %c0_i32 : i32, i32
  }
  func.func @transform_1(%arg0: i32) -> (i32, i32) {
    %c0_i32 = arith.constant 0 : i32
    %c0_i32_0 = arith.constant 0 : i32
    return %arg0, %c0_i32 : i32, i32
  }
  func.func @transform_2(%arg0: i32) -> (i32, i32, i32) {
    %c0_i32 = arith.constant 0 : i32
    %c0_i32_0 = arith.constant 0 : i32
    %c0_i32_1 = arith.constant 0 : i32
    return %arg0, %c0_i32, %c0_i32_0 : i32, i32, i32
  }
  func.func @transform_3(%arg0: i32) -> (i32, i32, i32) {
    %c0_i32 = arith.constant 0 : i32
    %c0_i32_0 = arith.constant 0 : i32
    %c0_i32_1 = arith.constant 0 : i32
    return %arg0, %c0_i32, %c0_i32_0 : i32, i32, i32
  }
}

</mosaic_0001>

<llo_original>
// kernel: tpu_custom_call.1
$region0: #{tpu_custom_call.1}
  #allocation0 [shape = 'u32[]', space=smem, size = 0x4, offset = 0x4, fixed_abs, tag = 'smem constant byte address 0x4 - core index']
  #allocation1 [shape = 'u32[144,128]{1,0:T(1,128)}', space=vmem, size = 0x12000, scoped, tag = 'internal scratch']
  %s0 = inlined_call_operand.hbm [shape: f32[8,192], index: 0, kind: input, shape index: {}]
  %s1 = inlined_call_operand.hbm [shape: f32[8,192], index: 1, kind: input, shape index: {}]
  %s2 = inlined_call_operand.vmem [shape: f32[1,1,8], index: 2, kind: input, shape index: {}]
  %s3 = inlined_call_operand.hbm [shape: f32[1,8,128], index: 3, kind: output, shape index: {}]
  %s4 = sld [smem:[#allocation0]]
  $region30: #{tpu_custom_call.1} parent=0
    _
  %s6 = ssub.s32 1, %s4
  %s7 = scalar_select 0, %s6, %s4
  $region1: #{tpu_custom_call.1} parent=0
    #allocation2 [shape = 'u8[8192]{0}', space=vmem, size = 0x2000, scoped, tag = 'input window, operand 0, single buffered']
    #allocation3 [shape = 's32[1]{0}', space=sflag, size = 0x4, scoped, tag = 'scoped memory for tpu_custom_call.1']
    #allocation4 [shape = 's32[1]{0}', space=sflag, size = 0x4, scoped, tag = 'scoped memory for tpu_custom_call.1']
    #allocation5 [shape = 'u8[8192]{0}', space=vmem, size = 0x2000, scoped, tag = 'input window, operand 1, single buffered']
    #allocation6 [shape = 's32[1]{0}', space=sflag, size = 0x4, scoped, tag = 'scoped memory for tpu_custom_call.1']
    #allocation7 [shape = 'u8[4096]{0}', space=vmem, size = 0x1000, scoped, tag = 'output window, operand 0, single buffered']
    %8 = vsyncpa [#allocation3], 0
    %9 = vsyncpa [#allocation6], 0
    %10 = vsyncpa [#allocation4], 0
    // Predicated region
    $region2: #{tpu_custom_call.1} parent=1 // pred_check
      _
    $region3: #{tpu_custom_call.1} parent=1 // pred_check_branch
      %12 = sbr.rel (0) target = $region5
    $region4: #{tpu_custom_call.1} parent=1 // pred_region
      %s14 = ssub.s32 256, 256
      %15 = vsyncadd [#allocation3], %s14
      %s17 = sshll.u32 [#allocation2], 4
      %s18 = int_to_ptr.vmem [resolvable:$true] %s17
      %20 = dma.hbm_to_vmem [thread:$0]  %s0, 256, %s18, [#allocation3]
    $region5: #{tpu_custom_call.1} parent=1 // pred_fallthru
      _
    // Predicated region
    $region6: #{tpu_custom_call.1} parent=1 // pred_check
      _
    $region7: #{tpu_custom_call.1} parent=1 // pred_check_branch
      %22 = sbr.rel (0) target = $region9
    $region8: #{tpu_custom_call.1} parent=1 // pred_region
      %s24 = ssub.s32 256, 256
      %25 = vsyncadd [#allocation6], %s24
      %s27 = sshll.u32 [#allocation5], 4
      %s28 = int_to_ptr.vmem [resolvable:$true] %s27
      %30 = dma.hbm_to_vmem [thread:$0]  %s1, 256, %s28, [#allocation6]
    $region9: #{tpu_custom_call.1} parent=1 // pred_fallthru
      _
    // Predicated region
    $region10: #{tpu_custom_call.1} parent=1 // pred_check
      _
    $region11: #{tpu_custom_call.1} parent=1 // pred_check_branch
      %32 = sbr.rel (0) target = $region13
    $region12: #{tpu_custom_call.1} parent=1 // pred_region
      _
    $region13: #{tpu_custom_call.1} parent=1 // pred_fallthru
      _
    // Predicated region
    $region14: #{tpu_custom_call.1} parent=1 // pred_check
      _
    $region15: #{tpu_custom_call.1} parent=1 // pred_check_branch
      %34 = sbr.rel (0) target = $region17
    $region16: #{tpu_custom_call.1} parent=1 // pred_region
      %35 = dma.done [#allocation3], 256
    $region17: #{tpu_custom_call.1} parent=1 // pred_fallthru
      _
    // Predicated region
    $region18: #{tpu_custom_call.1} parent=1 // pred_check
      _
    $region19: #{tpu_custom_call.1} parent=1 // pred_check_branch
      %37 = sbr.rel (0) target = $region21
    $region20: #{tpu_custom_call.1} parent=1 // pred_region
      %38 = dma.done [#allocation6], 256
    $region21: #{tpu_custom_call.1} parent=1 // pred_fallthru
      _
    %s39 = smul.u32 0, 8
    %v40 = vlaneseq
    %v41 = vshrl.u32 %v40, 7
    %v42 = vstv %s39
    %v43 = vadd.s32 %v42, %v41
    %vm44 = vcmp.lt.s32.totalorder %v43, 8
    %v45 = vld [vmem:[#allocation2] sm:$0xff]
    %v46 = vld [vmem:[#allocation2 + $0x8] sm:$0xff]
    %vm47 = vcmask 523264
    %v48 = vsel %vm47, %v46, -inf
    %v49 = vmax.f32 %v45, %v48
    %50 = vmax.xlane.f32.xlu0 %v49
    %v51 = vpop.xlane.xlu0 %50
    %v52 = vsub.f32 %v45, %v51
    %v53 = vsub.f32 %v46, %v51
    %v54 = vmul.f32 %v52, 1.442695
    %v55 = vpow.pop %v54
    %v56 = vmul.f32 %v53, 1.442695
    %v57 = vpow.pop %v56
    %v58 = vsel %vm47, %v57, 0.0
    %v59 = vadd.f32 %v55, %v58
    %60 = vadd.xlane.f32.xlu0 %v59
    %v61 = vpop.xlane.xlu0 %60
    %v62 = vlog2.pop %v61
    %v63 = vmul.f32 %v62, 0.6931472
    %v64 = vadd.f32 %v51, %v63
    %v65 = vld [vmem:[#allocation5] sm:$0xff]
    %v66 = vld [vmem:[#allocation5 + $0x8] sm:$0xff]
    %v67 = vmul.f32 %v65, %v45
    %v68 = vmul.f32 %v66, %v46
    %v69 = vsel %vm47, %v68, 0.0
    %v70 = vadd.f32 %v67, %v69
    %71 = vadd.xlane.f32.xlu0 %v70
    %v72 = vpop.xlane.xlu0 %71
    %vm73 = vcmp.gt.f32.partialorder %v65, 0.0
    %vm74 = vcmp.gt.f32.partialorder %v66, 0.0
    %v75 = vsel %vm73, %v65, 1.0
    %v76 = vsel %vm74, %v66, 1.0
    %v77 = vlog2.pop %v75
    %v78 = vmul.f32 %v77, 0.6931472
    %v79 = vlog2.pop %v76
    %v80 = vmul.f32 %v79, 0.6931472
    %v81 = vmul.f32 %v65, %v78
    %v82 = vmul.f32 %v66, %v80
    %v83 = vsel %vm73, %v81, 0.0
    %v84 = vsel %vm74, %v82, 0.0
    %v85 = vsel %vm47, %v84, 0.0
    %v86 = vadd.f32 %v83, %v85
    %87 = vadd.xlane.f32.xlu0 %v86
    %v88 = vpop.xlane.xlu0 %87
    %v89 = vsel %vm47, %v66, 0.0
    %v90 = vadd.f32 %v65, %v89
    %91 = vadd.xlane.f32.xlu0 %v90
    %v92 = vpop.xlane.xlu0 %91
    %v93 = vmul.f32 %v64, %v92
    %v94 = vsub.f32 %v72, %v93
    %v95 = vsub.f32 %v88, %v94
    %v96 = vsel %vm44, %v95, 0.0
    %v97 = vld [vmem:[%s2] sm:$0x1]
    %vm98 = vcmask 64512
    %v100 = vsel %vm98, %v97, 0
    %102 = vmatprep.subr.mxu0 0.0
    %103 = vmatpush1.msra.mxu0 0.0
    %104 = vmatprep.subr.mxu0 0.0
    %105 = vmatpush1.msra.mxu0 0.0
    %106 = vmatprep.subr.mxu0 0.0
    %107 = vmatpush1.msra.mxu0 0.0
    %108 = vmatprep.subr.mxu0 0.0
    %109 = vmatpush1.msra.mxu0 0.0
    %110 = vmatprep.subr.mxu0 0.0
    %111 = vmatpush1.msra.mxu0 0.0
    %112 = vmatprep.subr.mxu0 0.0
    %113 = vmatpush1.msra.mxu0 0.0
    %114 = vmatprep.subr.mxu0 0.0
    %115 = vmatpush1.msra.mxu0 0.0
    %116 = vmatprep.subr.mxu0 0.0
    %117 = vmatpush1.msra.mxu0 0.0
    %118 = vmatprep.subr.mxu0 0.0
    %119 = vmatpush1.msra.mxu0 0.0
    %120 = vmatprep.subr.mxu0 0.0
    %121 = vmatpush1.msra.mxu0 0.0
    %122 = vmatprep.subr.mxu0 0.0
    %123 = vmatpush1.msra.mxu0 0.0
    %124 = vmatprep.subr.mxu0 0.0
    %125 = vmatpush1.msra.mxu0 0.0
    %126 = vmatprep.subr.mxu0 0.0
    %127 = vmatpush1.msra.mxu0 0.0
    %128 = vmatprep.subr.mxu0 0.0
    %129 = vmatpush1.msra.mxu0 0.0
    %130 = vmatprep.subr.mxu0 0.0
    %131 = vmatpush1.msra.mxu0 0.0
    %132 = vmatprep.subr.mxu0 0.0
    %133 = vmatpush1.msra.mxu0 %v96
    %134 = vmatprep.subr.mxu0 0.0
    %135 = vmatpush2.msra.mxu0 0.0
    %136 = vmatprep.subr.mxu0 0.0
    %137 = vmatpush2.msra.mxu0 0.0
    %138 = vmatprep.subr.mxu0 0.0
    %139 = vmatpush2.msra.mxu0 0.0
    %140 = vmatprep.subr.mxu0 0.0
    %141 = vmatpush2.msra.mxu0 0.0
    %142 = vmatprep.subr.mxu0 0.0
    %143 = vmatpush2.msra.mxu0 0.0
    %144 = vmatprep.subr.mxu0 0.0
    %145 = vmatpush2.msra.mxu0 0.0
    %146 = vmatprep.subr.mxu0 0.0
    %147 = vmatpush2.msra.mxu0 0.0
    %148 = vmatprep.subr.mxu0 0.0
    %149 = vmatpush2.msra.mxu0 0.0
    %150 = vmatprep.subr.mxu0 0.0
    %151 = vmatpush2.msra.mxu0 0.0
    %152 = vmatprep.subr.mxu0 0.0
    %153 = vmatpush2.msra.mxu0 0.0
    %154 = vmatprep.subr.mxu0 0.0
    %155 = vmatpush2.msra.mxu0 0.0
    %156 = vmatprep.subr.mxu0 0.0
    %157 = vmatpush2.msra.mxu0 0.0
    %158 = vmatprep.subr.mxu0 0.0
    %159 = vmatpush2.msra.mxu0 0.0
    %160 = vmatprep.subr.mxu0 0.0
    %161 = vmatpush2.msra.mxu0 0.0
    %162 = vmatprep.subr.mxu0 0.0
    %163 = vmatpush2.msra.mxu0 0.0
    %164 = vmatprep.subr.mxu0 0.0
    %165 = vmatpush2.msra.mxu0 0.0
    %166 = vmatprep.mubr.f32.mxu0 0.0
    %167 = vmatmul.mubr.f32.gmra.mxu0 %v100
    %v168 = vpop.f32.mrf.mxu0
    %v169 = vadd.f32 0.0, %v168
    %v170 = vpop.f32.mrf.mxu0
    %171 = vdwg.mxu0
    %s173 = vtos %v169
    %v174 = vstv %s173
    %176 = vst [vmem:[#allocation7] sm:$0xff] %v174
    // Predicated region
    $region22: #{tpu_custom_call.1} parent=1 // pred_check
      _
    $region23: #{tpu_custom_call.1} parent=1 // pred_check_branch
      %178 = sbr.rel (0) target = $region25
    $region24: #{tpu_custom_call.1} parent=1 // pred_region
      %s180 = ssub.s32 128, 128
      %181 = vsyncadd [#allocation4], %s180
      %s183 = sshll.u32 [#allocation7], 4
      %s184 = int_to_ptr.vmem [resolvable:$true] %s183
      %186 = dma.vmem_to_hbm [thread:$0]  %s184, 128, %s3, [#allocation4]
    $region25: #{tpu_custom_call.1} parent=1 // pred_fallthru
      _
    // Predicated region
    $region26: #{tpu_custom_call.1} parent=1 // pred_check
      _
    $region27: #{tpu_custom_call.1} parent=1 // pred_check_branch
      %188 = sbr.rel (0) target = $region29
    $region28: #{tpu_custom_call.1} parent=1 // pred_region
      %189 = dma.done [#allocation4], 128
    $region29: #{tpu_custom_call.1} parent=1 // pred_fallthru
      _
    %190 = vsyncpa [#allocation3], 1
    %191 = vsyncpa [#allocation6], 1
    %192 = vsyncpa [#allocation4], 1

</llo_original>
